<compile_context>
chip_gen: v7x
topology: tpu7x:2x2x1
jax: 0.10.0
libtpu: 0.0.40
codegen_flags: <defaults>
</compile_context>

<pallas_src>
import jax
import jax.numpy as jnp
import numpy as np
from jax.experimental import pallas as pl
from jax.experimental.pallas import tpu as pltpu


def cfg_denoiser_kernel(sigma_ref, cscale_ref,               # SMEM scalars
                        x_ref, emb_ref,                       # per-batch VMEM tiles
                        w1t_ref, b1_ref, wct_ref, w2t_ref, b2_ref,  # weights (VMEM)
                        out_ref):
    b = pl.program_id(0)
    sig = sigma_ref[b]            # scalar sigma for this batch element
    cs = cscale_ref[0]            # cond_scale (scalar)

    x = x_ref[0]                  # [C, HW]  (spatial on lanes)
    c_in = 1.0 / jnp.sqrt(sig * sig + 1.0)
    xs = x * c_in                 # [C, HW]

    # Shared first-layer matmul (identical for both CFG halves): [Hd, HW]
    h0 = jnp.dot(w1t_ref[...], xs,
                 preferred_element_type=jnp.float32) + b1_ref[...]

    # Both conditioning projections in ONE matmul: [Hd, Dc] @ [Dc, 2] -> [Hd, 2]
    ch = jnp.dot(wct_ref[...], emb_ref[0],
                 preferred_element_type=jnp.float32)
    ch_u = ch[:, 0:1]             # [Hd, 1] broadcasts over HW lanes
    ch_c = ch[:, 1:2]

    relu_u = jnp.maximum(h0 + ch_u, 0.0)
    relu_c = jnp.maximum(h0 + ch_c, 0.0)

    # CFG blend before the (linear) second layer:
    #   uncond + (cond - uncond) * cond_scale  distributes exactly through
    #   W2^T @ (.) + b2 and x - sigma * (.)
    h_cfg = relu_u + cs * (relu_c - relu_u)   # [Hd, HW]

    eps = jnp.dot(w2t_ref[...], h_cfg,
                  preferred_element_type=jnp.float32) + b2_ref[...]   # [C, HW]

    out_ref[0] = x - sig * eps


def cfg_denoiser(x_nchw, sigma, uncond_emb, cond_emb, cond_scale, params):
    """x_nchw: [B,C,H,W], sigma: [B], uncond/cond_emb: [B,Dc], cond_scale: scalar."""
    B, C, H, W = x_nchw.shape
    HW = H * W
    Dc = uncond_emb.shape[1]
    W1, b1, Wc, W2, b2 = params
    Hd = W1.shape[1]

    # Free reshape: NCHW is already [B, C, HW]-contiguous. No transposes needed.
    x_chw = x_nchw.reshape(B, C, HW).astype(jnp.float32)
    # Stack uncond/cond embeddings -> one [B, Dc, 2] tile (one input, one matmul).
    emb = jnp.stack([uncond_emb.astype(jnp.float32),
                     cond_emb.astype(jnp.float32)], axis=-1)          # [B, Dc, 2]

    # Weights oriented for spatial-on-lanes matmuls (one-time tiny transposes).
    # TODO(synk): for v5e, casting x/weight matmul inputs to bf16 halves DMA bytes
    # and doubles MXU rate; kept in f32 here to preserve exact reference numerics.
    w1t = jnp.transpose(W1).astype(jnp.float32)     # [Hd, C]
    wct = jnp.transpose(Wc).astype(jnp.float32)     # [Hd, Dc]
    w2t = jnp.transpose(W2).astype(jnp.float32)     # [C, Hd]
    b1c = b1.reshape(Hd, 1).astype(jnp.float32)
    b2c = b2.reshape(C, 1).astype(jnp.float32)

    sigma = sigma.astype(jnp.float32)
    cscale = jnp.asarray([cond_scale], dtype=jnp.float32)

    smem_spec = pl.BlockSpec(memory_space=pltpu.MemorySpace.SMEM)

    out_chw = pl.pallas_call(
        cfg_denoiser_kernel,
        out_shape=jax.ShapeDtypeStruct((B, C, HW), jnp.float32),
        grid_spec=pltpu.PrefetchScalarGridSpec(
            num_scalar_prefetch=0,
            grid=(B,),
            in_specs=[
                smem_spec,                                          # sigma  [B]
                smem_spec,                                          # cond_scale [1]
                pl.BlockSpec((1, C, HW), lambda b: (b, 0, 0)),      # x  [B,C,HW]
                pl.BlockSpec((1, Dc, 2), lambda b: (b, 0, 0)),      # emb [B,Dc,2]
                pl.BlockSpec((Hd, C), lambda b: (0, 0)),            # W1^T
                pl.BlockSpec((Hd, 1), lambda b: (0, 0)),            # b1
                pl.BlockSpec((Hd, Dc), lambda b: (0, 0)),           # Wc^T
                pl.BlockSpec((C, Hd), lambda b: (0, 0)),            # W2^T
                pl.BlockSpec((C, 1), lambda b: (0, 0)),             # b2
            ],
            out_specs=pl.BlockSpec((1, C, HW), lambda b: (b, 0, 0)),
        ),
        compiler_params=pltpu.CompilerParams(
            dimension_semantics=("parallel",)),      # B=2 steps -> both v7x TCs busy
    )(sigma, cscale, x_chw, emb, w1t, b1c, wct, w2t, b2c)

    return out_chw.reshape(B, C, H, W)               # free reshape back to NCHW


def _reference(x_nchw, sigma, uncond_emb, cond_emb, cond_scale, params):
    """Pure-JAX reference reproducing the PyTorch CFGDenoiser.forward semantics."""
    W1, b1, Wc, W2, b2 = params
    B, C, H, W = x_nchw.shape
    x_in = jnp.concatenate([x_nchw] * 2)                    # cat([x]*2)
    sigma_in = jnp.concatenate([sigma] * 2)                 # cat([sigma]*2)
    cond_in = jnp.concatenate([uncond_emb, cond_emb])       # cat([uncond, cond])

    xf = jnp.transpose(x_in, (0, 2, 3, 1)).reshape(2 * B, H * W, C)
    c_in = (1.0 / jnp.sqrt(sigma_in ** 2 + 1.0))[:, None, None]
    h = jnp.einsum("bsc,ch->bsh", xf * c_in, W1) + b1[None, None, :] \
        + (cond_in @ Wc)[:, None, :]
    h = jnp.maximum(h, 0.0)
    eps = jnp.einsum("bsh,hc->bsc", h, W2) + b2[None, None, :]
    den = xf - sigma_in[:, None, None] * eps
    den = den.reshape(2 * B, H, W, C).transpose(0, 3, 1, 2)
    u_out, c_out = den[:B], den[B:]                         # chunk(2)
    return u_out + (c_out - u_out) * cond_scale


if __name__ == "__main__":
    B, C, H, W = 2, 4, 16, 16
    Dc, Hd = 8, 32
    cond_scale = 7.5

    key = jax.random.PRNGKey(0)
    k = jax.random.split(key, 9)
    x = jax.random.normal(k[0], (B, C, H, W), dtype=jnp.float32)
    sigma = jax.random.uniform(k[1], (B,), dtype=jnp.float32, minval=0.5, maxval=2.0)
    uncond_emb = jax.random.normal(k[2], (B, Dc), dtype=jnp.float32)
    cond_emb = jax.random.normal(k[3], (B, Dc), dtype=jnp.float32)

    # Deterministic synthetic inner-model weights (1x1 conv MLP over channels).
    W1 = jax.random.normal(k[4], (C, Hd), dtype=jnp.float32) * 0.2
    b1 = jax.random.normal(k[5], (Hd,), dtype=jnp.float32) * 0.05
    Wc = jax.random.normal(k[6], (Dc, Hd), dtype=jnp.float32) * 0.2
    W2 = jax.random.normal(k[7], (Hd, C), dtype=jnp.float32) * 0.2
    b2 = jax.random.normal(k[8], (C,), dtype=jnp.float32) * 0.05
    params = (W1, b1, Wc, W2, b2)

    out = cfg_denoiser(x, sigma, uncond_emb, cond_emb, cond_scale, params)
    out = jax.block_until_ready(out)

    ref = _reference(x, sigma, uncond_emb, cond_emb, cond_scale, params)
    np.testing.assert_allclose(np.asarray(out), np.asarray(ref), rtol=1e-5, atol=1e-5)

    print("KERNEL_OK")
</pallas_src>

<mosaic_0001>
module attributes {stable_mosaic.version = 11 : i64} {
  func.func @cfg_denoiser_kernel(%arg0: i32, %arg1: memref<2xf32, #tpu.memory_space<smem>>, %arg2: memref<1xf32, #tpu.memory_space<smem>>, %arg3: memref<1x4x256xf32, #tpu.memory_space<vmem>>, %arg4: memref<1x8x2xf32, #tpu.memory_space<vmem>>, %arg5: memref<32x4xf32, #tpu.memory_space<vmem>>, %arg6: memref<32x1xf32, #tpu.memory_space<vmem>>, %arg7: memref<32x8xf32, #tpu.memory_space<vmem>>, %arg8: memref<4x32xf32, #tpu.memory_space<vmem>>, %arg9: memref<4x1xf32, #tpu.memory_space<vmem>>, %arg10: memref<1x4x256xf32, #tpu.memory_space<vmem>>) attributes {dimension_semantics = [#tpu.dimension_semantics<parallel>], iteration_bounds = array<i64: 2>, scalar_prefetch = 0 : i64, scratch_operands = 0 : i64, tpu.core_type = #tpu.core_type<tc>, window_params = [{transform_indices = @transform_0, window_bounds = array<i64: 2>}, {transform_indices = @transform_1, window_bounds = array<i64: 1>}, {transform_indices = @transform_2, window_bounds = array<i64: 1, 4, 256>}, {transform_indices = @transform_3, window_bounds = array<i64: 1, 8, 2>}, {pipeline_mode = #tpu.pipeline_mode<synchronous>, transform_indices = @transform_4, window_bounds = array<i64: 32, 4>}, {pipeline_mode = #tpu.pipeline_mode<synchronous>, transform_indices = @transform_5, window_bounds = array<i64: 32, 1>}, {pipeline_mode = #tpu.pipeline_mode<synchronous>, transform_indices = @transform_6, window_bounds = array<i64: 32, 8>}, {pipeline_mode = #tpu.pipeline_mode<synchronous>, transform_indices = @transform_7, window_bounds = array<i64: 4, 32>}, {pipeline_mode = #tpu.pipeline_mode<synchronous>, transform_indices = @transform_8, window_bounds = array<i64: 4, 1>}, {transform_indices = @transform_9, window_bounds = array<i64: 1, 4, 256>}]} {
    %0 = arith.index_cast %arg0 : i32 to index
    %1 = memref.load %arg1[%0] : memref<2xf32, #tpu.memory_space<smem>>
    %c0 = arith.constant 0 : index
    %2 = memref.load %arg2[%c0] : memref<1xf32, #tpu.memory_space<smem>>
    %c0_0 = arith.constant 0 : index
    %c0_1 = arith.constant 0 : index
    %c0_2 = arith.constant 0 : index
    %3 = vector.load %arg3[%c0_0, %c0_1, %c0_2] : memref<1x4x256xf32, #tpu.memory_space<vmem>>, vector<1x4x256xf32>
    %4 = vector.shape_cast %3 : vector<1x4x256xf32> to vector<4x256xf32>
    %5 = arith.mulf %1, %1 : f32
    %cst = arith.constant 1.000000e+00 : f32
    %6 = arith.addf %5, %cst : f32
    %7 = math.sqrt %6 : f32
    %cst_3 = arith.constant 1.000000e+00 : f32
    %8 = arith.divf %cst_3, %7 : f32
    %9 = vector.broadcast %8 : f32 to vector<4x256xf32>
    %10 = arith.mulf %4, %9 : vector<4x256xf32>
    %c0_4 = arith.constant 0 : index
    %c0_5 = arith.constant 0 : index
    %11 = vector.load %arg5[%c0_4, %c0_5] : memref<32x4xf32, #tpu.memory_space<vmem>>, vector<32x4xf32>
    %cst_6 = arith.constant dense<0.000000e+00> : vector<32x256xf32>
    %12 = tpu.matmul %11, %10, %cst_6 {dimension_numbers = #tpu.dot_dimension_numbers<[1], [0], [0], [1], [0, 0, 1, 1], [], []>} : vector<32x4xf32>, vector<4x256xf32>, vector<32x256xf32> -> vector<32x256xf32>
    %c0_7 = arith.constant 0 : index
    %c0_8 = arith.constant 0 : index
    %13 = vector.load %arg6[%c0_7, %c0_8] : memref<32x1xf32, #tpu.memory_space<vmem>>, vector<32x1xf32>
    %14 = vector.broadcast %13 : vector<32x1xf32> to vector<32x256xf32>
    %15 = arith.addf %12, %14 : vector<32x256xf32>
    %c0_9 = arith.constant 0 : index
    %c0_10 = arith.constant 0 : index
    %16 = vector.load %arg7[%c0_9, %c0_10] : memref<32x8xf32, #tpu.memory_space<vmem>>, vector<32x8xf32>
    %c0_11 = arith.constant 0 : index
    %c0_12 = arith.constant 0 : index
    %c0_13 = arith.constant 0 : index
    %17 = vector.load %arg4[%c0_11, %c0_12, %c0_13] : memref<1x8x2xf32, #tpu.memory_space<vmem>>, vector<1x8x2xf32>
    %18 = vector.shape_cast %17 : vector<1x8x2xf32> to vector<8x2xf32>
    %cst_14 = arith.constant dense<0.000000e+00> : vector<32x2xf32>
    %19 = tpu.matmul %16, %18, %cst_14 {dimension_numbers = #tpu.dot_dimension_numbers<[1], [0], [0], [1], [0, 0, 1, 1], [], []>} : vector<32x8xf32>, vector<8x2xf32>, vector<32x2xf32> -> vector<32x2xf32>
    %20 = vector.extract_strided_slice %19 {offsets = [0, 0], sizes = [32, 1], strides = [1, 1]} : vector<32x2xf32> to vector<32x1xf32>
    %21 = vector.extract_strided_slice %19 {offsets = [0, 1], sizes = [32, 1], strides = [1, 1]} : vector<32x2xf32> to vector<32x1xf32>
    %22 = vector.broadcast %20 : vector<32x1xf32> to vector<32x256xf32>
    %23 = arith.addf %15, %22 : vector<32x256xf32>
    %cst_15 = arith.constant 0.000000e+00 : f32
    %24 = vector.broadcast %cst_15 : f32 to vector<32x256xf32>
    %25 = arith.maximumf %23, %24 : vector<32x256xf32>
    %26 = vector.broadcast %21 : vector<32x1xf32> to vector<32x256xf32>
    %27 = arith.addf %15, %26 : vector<32x256xf32>
    %cst_16 = arith.constant 0.000000e+00 : f32
    %28 = vector.broadcast %cst_16 : f32 to vector<32x256xf32>
    %29 = arith.maximumf %27, %28 : vector<32x256xf32>
    %30 = arith.subf %29, %25 : vector<32x256xf32>
    %31 = vector.broadcast %2 : f32 to vector<32x256xf32>
    %32 = arith.mulf %31, %30 : vector<32x256xf32>
    %33 = arith.addf %25, %32 : vector<32x256xf32>
    %c0_17 = arith.constant 0 : index
    %c0_18 = arith.constant 0 : index
    %34 = vector.load %arg8[%c0_17, %c0_18] : memref<4x32xf32, #tpu.memory_space<vmem>>, vector<4x32xf32>
    %cst_19 = arith.constant dense<0.000000e+00> : vector<4x256xf32>
    %35 = tpu.matmul %34, %33, %cst_19 {dimension_numbers = #tpu.dot_dimension_numbers<[1], [0], [0], [1], [0, 0, 1, 1], [], []>} : vector<4x32xf32>, vector<32x256xf32>, vector<4x256xf32> -> vector<4x256xf32>
    %c0_20 = arith.constant 0 : index
    %c0_21 = arith.constant 0 : index
    %36 = vector.load %arg9[%c0_20, %c0_21] : memref<4x1xf32, #tpu.memory_space<vmem>>, vector<4x1xf32>
    %37 = vector.broadcast %36 : vector<4x1xf32> to vector<4x256xf32>
    %38 = arith.addf %35, %37 : vector<4x256xf32>
    %39 = vector.broadcast %1 : f32 to vector<4x256xf32>
    %40 = arith.mulf %39, %38 : vector<4x256xf32>
    %41 = arith.subf %4, %40 : vector<4x256xf32>
    %c0_22 = arith.constant 0 : index
    %c0_23 = arith.constant 0 : index
    %c0_24 = arith.constant 0 : index
    %42 = vector.load %arg10[%c0_22, %c0_23, %c0_24] : memref<1x4x256xf32, #tpu.memory_space<vmem>>, vector<1x4x256xf32>
    %43 = vector.shape_cast %42 : vector<1x4x256xf32> to vector<4x256xf32>
    %44 = vector.shape_cast %41 : vector<4x256xf32> to vector<1x4x256xf32>
    tpu.vector_store %arg10[%c0_22, %c0_23, %c0_24], %44 {strides = array<i32>} : memref<1x4x256xf32, #tpu.memory_space<vmem>>, vector<1x4x256xf32>,
    return
  }
  func.func @transform_0(%arg0: i32) -> i32 {
    %c0_i32 = arith.constant 0 : i32
    %c0_i32_0 = arith.constant 0 : i32
    return %c0_i32 : i32
  }
  func.func @transform_1(%arg0: i32) -> i32 {
    %c0_i32 = arith.constant 0 : i32
    %c0_i32_0 = arith.constant 0 : i32
    return %c0_i32 : i32
  }
  func.func @transform_2(%arg0: i32) -> (i32, i32, i32) {
    %c0_i32 = arith.constant 0 : i32
    %c0_i32_0 = arith.constant 0 : i32
    %c0_i32_1 = arith.constant 0 : i32
    return %arg0, %c0_i32, %c0_i32_0 : i32, i32, i32
  }
  func.func @transform_3(%arg0: i32) -> (i32, i32, i32) {
    %c0_i32 = arith.constant 0 : i32
    %c0_i32_0 = arith.constant 0 : i32
    %c0_i32_1 = arith.constant 0 : i32
    return %arg0, %c0_i32, %c0_i32_0 : i32, i32, i32
  }
  func.func @transform_4(%arg0: i32) -> (i32, i32) {
    %c0_i32 = arith.constant 0 : i32
    %c0_i32_0 = arith.constant 0 : i32
    %c0_i32_1 = arith.constant 0 : i32
    return %c0_i32, %c0_i32_0 : i32, i32
  }
  func.func @transform_5(%arg0: i32) -> (i32, i32) {
    %c0_i32 = arith.constant 0 : i32
    %c0_i32_0 = arith.constant 0 : i32
    %c0_i32_1 = arith.constant 0 : i32
    return %c0_i32, %c0_i32_0 : i32, i32
  }
  func.func @transform_6(%arg0: i32) -> (i32, i32) {
    %c0_i32 = arith.constant 0 : i32
    %c0_i32_0 = arith.constant 0 : i32
    %c0_i32_1 = arith.constant 0 : i32
    return %c0_i32, %c0_i32_0 : i32, i32
  }
  func.func @transform_7(%arg0: i32) -> (i32, i32) {
    %c0_i32 = arith.constant 0 : i32
    %c0_i32_0 = arith.constant 0 : i32
    %c0_i32_1 = arith.constant 0 : i32
    return %c0_i32, %c0_i32_0 : i32, i32
  }
  func.func @transform_8(%arg0: i32) -> (i32, i32) {
    %c0_i32 = arith.constant 0 : i32
    %c0_i32_0 = arith.constant 0 : i32
    %c0_i32_1 = arith.constant 0 : i32
    return %c0_i32, %c0_i32_0 : i32, i32
  }
  func.func @transform_9(%arg0: i32) -> (i32, i32, i32) {
    %c0_i32 = arith.constant 0 : i32
    %c0_i32_0 = arith.constant 0 : i32
    %c0_i32_1 = arith.constant 0 : i32
    return %arg0, %c0_i32, %c0_i32_0 : i32, i32, i32
  }
}

</mosaic_0001>

<llo_original>
// kernel: tpu_custom_call.1
$region0: #{tpu_custom_call.1}
  #allocation0 [shape = 'u32[]', space=smem, size = 0x4, offset = 0x4, fixed_abs, tag = 'smem constant byte address 0x4 - core index']
  #allocation1 [shape = 'u32[144,128]{1,0:T(1,128)}', space=vmem, size = 0x12000, scoped, tag = 'internal scratch']
  #allocation2 [shape = 'f32[1]{0:T(128)S(6)}', space=smem, size = 0x200, scoped, tag = 'scoped memory for tpu_custom_call.1']
  %s0 = inlined_call_operand.vmem [shape: f32[2], index: 0, kind: input, shape index: {}]
  %s1 = inlined_call_operand.<no memory space> [shape: f32[1], index: 1, kind: input, shape index: {}]
  %s2 = inlined_call_operand.vmem [shape: f32[2,4,256], index: 2, kind: input, shape index: {}]
  %s3 = inlined_call_operand.vmem [shape: f32[2,8,2], index: 3, kind: input, shape index: {}]
  %s4 = inlined_call_operand.vmem [shape: f32[32,4], index: 4, kind: input, shape index: {}]
  %s5 = inlined_call_operand.vmem [shape: f32[32,1], index: 5, kind: input, shape index: {}]
  %s6 = inlined_call_operand.vmem [shape: f32[32,8], index: 6, kind: input, shape index: {}]
  %s7 = inlined_call_operand.vmem [shape: f32[4,32], index: 7, kind: input, shape index: {}]
  %s8 = inlined_call_operand.vmem [shape: f32[4,1], index: 8, kind: input, shape index: {}]
  %s9 = inlined_call_operand.hbm [shape: f32[2,4,256], index: 9, kind: output, shape index: {}]
  %s10 = sld [smem:[#allocation0]]
  $region73: #{tpu_custom_call.1} parent=0
    _
  %s12 = ssub.s32 1, %s10
  %s13 = scalar_select 0, %s12, %s10
  %14 = sst [smem:[#allocation2]] %s1
  $region1: #{tpu_custom_call.1} parent=0
    #allocation3 [shape = 'u8[512]{0}', space=smem, size = 0x200, scoped, tag = 'input window, operand 0, single buffered']
    #allocation4 [shape = 's32[2]{0}', space=sflag, size = 0x8, scoped, tag = 'scoped memory for tpu_custom_call.1']
    #allocation5 [shape = 's32[2]{0}', space=sflag, size = 0x8, scoped, tag = 'scoped memory for tpu_custom_call.1']
    #allocation6 [shape = 'u8[8192]{0}', space=vmem, size = 0x2000, scoped, tag = 'output window, operand 0']
    %15 = vsyncpa [#allocation5], 0
    %16 = vsyncpa [#allocation4], 0
    %s17 = scalar_lea.sflag [#allocation4], 1
    %18 = vsyncpa %s17, 0
    loop: start=0, step=1, limit=4
    $region2: #{tpu_custom_call.1} parent=1 // loop_pre_header
      _
    $region3: #{tpu_custom_call.1} parent=1 // loop_header
      %s20 = sphi 0, %s24
      %p21 = scmp.ge.s32.totalorder %s20, 4
      %s28 = sphi 0, %s28
      %s30 = sphi 0, %s28
      %s31 = sphi 0, %s30
      %s45 = sphi 0, %s31
      %s49 = sphi 0, %s49
      %s51 = sphi 0, %s49
      %s52 = sphi 0, %s51
      %s66 = sphi 0, %s52
      %s72 = sphi 0, %s74
      %s75 = sphi 0, %s72
      %s76 = sphi 0, %s75
      %s92 = sphi 0, %s76
      %s98 = sphi 0, %s100
      %s101 = sphi 0, %s98
      %s102 = sphi 0, %s101
      %s118 = sphi 0, %s102
      %s122 = sphi 0, %s122
      %s124 = sphi 0, %s122
      %s125 = sphi 0, %s124
      %s139 = sphi 0, %s125
      %s143 = sphi 0, %s143
      %s145 = sphi 0, %s143
      %s146 = sphi 0, %s145
      %s160 = sphi 0, %s146
      %s164 = sphi 0, %s164
      %s166 = sphi 0, %s164
      %s167 = sphi 0, %s166
      %s181 = sphi 0, %s167
      %s185 = sphi 0, %s185
      %s187 = sphi 0, %s185
      %s188 = sphi 0, %s187
      %s202 = sphi 0, %s188
      %s206 = sphi 0, %s206
      %s208 = sphi 0, %s206
      %s209 = sphi 0, %s208
      %s223 = sphi 0, %s209
      %s229 = sphi 0, %s231
      %s232 = sphi 0, %s229
      %s233 = sphi 0, %s232
      %s249 = sphi 0, %s233
    $region4: #{tpu_custom_call.1} parent=1 // loop_header_branch
      %23 = sbr.rel (%p21) target = $region8
    $region5: #{tpu_custom_call.1} parent=1 // loop_body
      %s25 = ssub.s32 %s20, 1
      %s26 = ssub.s32 %s20, 2
      %s27 = sadd.s32 %s20, 1
      %s29 = sadd.s32 %s28, 1
      %p32 = scmp.eq.s32.totalorder %s20, 1
      %p33 = scmp.ne.s32.totalorder %s28, %s30
      %p34 = scmp.eq.s32.totalorder %s20, 0
      %p35 = por %p33, %p34
      %p36 = scmp.ne.s32.totalorder %s28, %s30
      %p37 = scmp.eq.s32.totalorder %s25, 1
      %p38 = por %p36, %p37
      %p39 = scmp.ne.s32.totalorder %s30, %s31
      %p40 = scmp.eq.s32.totalorder %s25, 0
      %p41 = por %p39, %p40
      %p42 = scmp.ne.s32.totalorder %s30, %s31
      %p43 = scmp.eq.s32.totalorder %s26, 1
      %p44 = por %p42, %p43
      %p46 = scmp.ne.s32.totalorder %s31, %s45
      %p47 = scmp.eq.s32.totalorder %s26, 0
      %p48 = por %p46, %p47
      %s50 = sadd.s32 %s49, 1
      %p53 = scmp.eq.s32.totalorder %s20, 1
      %p54 = scmp.ne.s32.totalorder %s49, %s51
      %p55 = scmp.eq.s32.totalorder %s20, 0
      %p56 = por %p54, %p55
      %p57 = scmp.ne.s32.totalorder %s49, %s51
      %p58 = scmp.eq.s32.totalorder %s25, 1
      %p59 = por %p57, %p58
      %p60 = scmp.ne.s32.totalorder %s51, %s52
      %p61 = scmp.eq.s32.totalorder %s25, 0
      %p62 = por %p60, %p61
      %p63 = scmp.ne.s32.totalorder %s51, %s52
      %p64 = scmp.eq.s32.totalorder %s26, 1
      %p65 = por %p63, %p64
      %p67 = scmp.ne.s32.totalorder %s52, %s66
      %p68 = scmp.eq.s32.totalorder %s26, 0
      %p69 = por %p67, %p68
      %s70 = ssub.s32 %s20, %s27
      %p71 = scmp.eq.s32.totalorder %s70, 0
      %s73 = sadd.s32 %s72, 1
      %s74 = scalar_select %p71, %s72, %s73
      %p77 = pneg %p71
      %p78 = scmp.eq.s32.totalorder %s20, 1
      %p79 = por %p77, %p78
      %p80 = scmp.ne.s32.totalorder %s72, %s75
      %p81 = scmp.eq.s32.totalorder %s20, 0
      %p82 = por %p80, %p81
      %p83 = scmp.ne.s32.totalorder %s72, %s75
      %p84 = scmp.eq.s32.totalorder %s25, 1
      %p85 = por %p83, %p84
      %p86 = scmp.ne.s32.totalorder %s75, %s76
      %p87 = scmp.eq.s32.totalorder %s25, 0
      %p88 = por %p86, %p87
      %p89 = scmp.ne.s32.totalorder %s75, %s76
      %p90 = scmp.eq.s32.totalorder %s26, 1
      %p91 = por %p89, %p90
      %p93 = scmp.ne.s32.totalorder %s76, %s92
      %p94 = scmp.eq.s32.totalorder %s26, 0
      %p95 = por %p93, %p94
      %s96 = ssub.s32 %s20, %s27
      %p97 = scmp.eq.s32.totalorder %s96, 0
      %s99 = sadd.s32 %s98, 1
      %s100 = scalar_select %p97, %s98, %s99
      %p103 = pneg %p97
      %p104 = scmp.eq.s32.totalorder %s20, 1
      %p105 = por %p103, %p104
      %p106 = scmp.ne.s32.totalorder %s98, %s101
      %p107 = scmp.eq.s32.totalorder %s20, 0
      %p108 = por %p106, %p107
      %p109 = scmp.ne.s32.totalorder %s98, %s101
      %p110 = scmp.eq.s32.totalorder %s25, 1
      %p111 = por %p109, %p110
      %p112 = scmp.ne.s32.totalorder %s101, %s102
      %p113 = scmp.eq.s32.totalorder %s25, 0
      %p114 = por %p112, %p113
      %p115 = scmp.ne.s32.totalorder %s101, %s102
      %p116 = scmp.eq.s32.totalorder %s26, 1
      %p117 = por %p115, %p116
      %p119 = scmp.ne.s32.totalorder %s102, %s118
      %p120 = scmp.eq.s32.totalorder %s26, 0
      %p121 = por %p119, %p120
      %s123 = sadd.s32 %s122, 1
      %p126 = scmp.eq.s32.totalorder %s20, 1
      %p127 = scmp.ne.s32.totalorder %s122, %s124
      %p128 = scmp.eq.s32.totalorder %s20, 0
      %p129 = por %p127, %p128
      %p130 = scmp.ne.s32.totalorder %s122, %s124
      %p131 = scmp.eq.s32.totalorder %s25, 1
      %p132 = por %p130, %p131
      %p133 = scmp.ne.s32.totalorder %s124, %s125
      %p134 = scmp.eq.s32.totalorder %s25, 0
      %p135 = por %p133, %p134
      %p136 = scmp.ne.s32.totalorder %s124, %s125
      %p137 = scmp.eq.s32.totalorder %s26, 1
      %p138 = por %p136, %p137
      %p140 = scmp.ne.s32.totalorder %s125, %s139
      %p141 = scmp.eq.s32.totalorder %s26, 0
      %p142 = por %p140, %p141
      %s144 = sadd.s32 %s143, 1
      %p147 = scmp.eq.s32.totalorder %s20, 1
      %p148 = scmp.ne.s32.totalorder %s143, %s145
      %p149 = scmp.eq.s32.totalorder %s20, 0
      %p150 = por %p148, %p149
      %p151 = scmp.ne.s32.totalorder %s143, %s145
      %p152 = scmp.eq.s32.totalorder %s25, 1
      %p153 = por %p151, %p152
      %p154 = scmp.ne.s32.totalorder %s145, %s146
      %p155 = scmp.eq.s32.totalorder %s25, 0
      %p156 = por %p154, %p155
      %p157 = scmp.ne.s32.totalorder %s145, %s146
      %p158 = scmp.eq.s32.totalorder %s26, 1
      %p159 = por %p157, %p158
      %p161 = scmp.ne.s32.totalorder %s146, %s160
      %p162 = scmp.eq.s32.totalorder %s26, 0
      %p163 = por %p161, %p162
      %s165 = sadd.s32 %s164, 1
      %p168 = scmp.eq.s32.totalorder %s20, 1
      %p169 = scmp.ne.s32.totalorder %s164, %s166
      %p170 = scmp.eq.s32.totalorder %s20, 0
      %p171 = por %p169, %p170
      %p172 = scmp.ne.s32.totalorder %s164, %s166
      %p173 = scmp.eq.s32.totalorder %s25, 1
      %p174 = por %p172, %p173
      %p175 = scmp.ne.s32.totalorder %s166, %s167
      %p176 = scmp.eq.s32.totalorder %s25, 0
      %p177 = por %p175, %p176
      %p178 = scmp.ne.s32.totalorder %s166, %s167
      %p179 = scmp.eq.s32.totalorder %s26, 1
      %p180 = por %p178, %p179
      %p182 = scmp.ne.s32.totalorder %s167, %s181
      %p183 = scmp.eq.s32.totalorder %s26, 0
      %p184 = por %p182, %p183
      %s186 = sadd.s32 %s185, 1
      %p189 = scmp.eq.s32.totalorder %s20, 1
      %p190 = scmp.ne.s32.totalorder %s185, %s187
      %p191 = scmp.eq.s32.totalorder %s20, 0
      %p192 = por %p190, %p191
      %p193 = scmp.ne.s32.totalorder %s185, %s187
      %p194 = scmp.eq.s32.totalorder %s25, 1
      %p195 = por %p193, %p194
      %p196 = scmp.ne.s32.totalorder %s187, %s188
      %p197 = scmp.eq.s32.totalorder %s25, 0
      %p198 = por %p196, %p197
      %p199 = scmp.ne.s32.totalorder %s187, %s188
      %p200 = scmp.eq.s32.totalorder %s26, 1
      %p201 = por %p199, %p200
      %p203 = scmp.ne.s32.totalorder %s188, %s202
      %p204 = scmp.eq.s32.totalorder %s26, 0
      %p205 = por %p203, %p204
      %s207 = sadd.s32 %s206, 1
      %p210 = scmp.eq.s32.totalorder %s20, 1
      %p211 = scmp.ne.s32.totalorder %s206, %s208
      %p212 = scmp.eq.s32.totalorder %s20, 0
      %p213 = por %p211, %p212
      %p214 = scmp.ne.s32.totalorder %s206, %s208
      %p215 = scmp.eq.s32.totalorder %s25, 1
      %p216 = por %p214, %p215
      %p217 = scmp.ne.s32.totalorder %s208, %s209
      %p218 = scmp.eq.s32.totalorder %s25, 0
      %p219 = por %p217, %p218
      %p220 = scmp.ne.s32.totalorder %s208, %s209
      %p221 = scmp.eq.s32.totalorder %s26, 1
      %p222 = por %p220, %p221
      %p224 = scmp.ne.s32.totalorder %s209, %s223
      %p225 = scmp.eq.s32.totalorder %s26, 0
      %p226 = por %p224, %p225
      %s227 = ssub.s32 %s20, %s27
      %p228 = scmp.eq.s32.totalorder %s227, 0
      %s230 = sadd.s32 %s229, 1
      %s231 = scalar_select %p228, %s229, %s230
      %p234 = pneg %p228
      %p235 = scmp.eq.s32.totalorder %s20, 1
      %p236 = por %p234, %p235
      %p237 = scmp.ne.s32.totalorder %s229, %s232
      %p238 = scmp.eq.s32.totalorder %s20, 0
      %p239 = por %p237, %p238
      %p240 = scmp.ne.s32.totalorder %s229, %s232
      %p241 = scmp.eq.s32.totalorder %s25, 1
      %p242 = por %p240, %p241
      %p243 = scmp.ne.s32.totalorder %s232, %s233
      %p244 = scmp.eq.s32.totalorder %s25, 0
      %p245 = por %p243, %p244
      %p246 = scmp.ne.s32.totalorder %s232, %s233
      %p247 = scmp.eq.s32.totalorder %s26, 1
      %p248 = por %p246, %p247
      %p250 = scmp.ne.s32.totalorder %s233, %s249
      %p251 = scmp.eq.s32.totalorder %s26, 0
      %p252 = por %p250, %p251
      %p253 = scmp.le.s32.totalorder 1, %s20
      %p254 = scmp.lt.s32.totalorder %s20, 3
      %p255 = pnand %p253, %p254
      %p256 = pneg %p255
      // Predicated region
      $region9: #{tpu_custom_call.1} parent=5 // pred_check
        _
      $region10: #{tpu_custom_call.1} parent=5 // pred_check_branch
        %258 = sbr.rel (%p255) target = $region12
      $region11: #{tpu_custom_call.1} parent=5 // pred_region
        %s259 = ssub.s32 %s20, 1
        // Predicated region
        $region13: #{tpu_custom_call.1} parent=11 // pred_check
          %p260 = pneg %p41
        $region14: #{tpu_custom_call.1} parent=11 // pred_check_branch
          %262 = sbr.rel (%p260) target = $region16
        $region15: #{tpu_custom_call.1} parent=11 // pred_region
          %s264 = ssub.s32 16, 16
          %265 = vsyncadd [#allocation5], %s264
          %s267 = sshll.u32 %s0, 4
          %s268 = int_to_ptr.vmem [resolvable:$true] %s267
          %270 = dma.vmem_to_smem %s268, 16, [#allocation3], [#allocation5]
        $region16: #{tpu_custom_call.1} parent=11 // pred_fallthru
          _
        // Predicated region
        $region17: #{tpu_custom_call.1} parent=11 // pred_check
          %p271 = pneg %p62
        $region18: #{tpu_custom_call.1} parent=11 // pred_check_branch
          %273 = sbr.rel (%p271) target = $region20
        $region19: #{tpu_custom_call.1} parent=11 // pred_region
          _
        $region20: #{tpu_custom_call.1} parent=11 // pred_fallthru
          _
        // Predicated region
        $region21: #{tpu_custom_call.1} parent=11 // pred_check
          %p274 = pneg %p135
        $region22: #{tpu_custom_call.1} parent=11 // pred_check_branch
          %276 = sbr.rel (%p274) target = $region24
        $region23: #{tpu_custom_call.1} parent=11 // pred_region
          _
        $region24: #{tpu_custom_call.1} parent=11 // pred_fallthru
          _
        // Predicated region
        $region25: #{tpu_custom_call.1} parent=11 // pred_check
          %p277 = pneg %p156
        $region26: #{tpu_custom_call.1} parent=11 // pred_check_branch
          %279 = sbr.rel (%p277) target = $region28
        $region27: #{tpu_custom_call.1} parent=11 // pred_region
          _
        $region28: #{tpu_custom_call.1} parent=11 // pred_fallthru
          _
        // Predicated region
        $region29: #{tpu_custom_call.1} parent=11 // pred_check
          %p280 = pneg %p177
        $region30: #{tpu_custom_call.1} parent=11 // pred_check_branch
          %282 = sbr.rel (%p280) target = $region32
        $region31: #{tpu_custom_call.1} parent=11 // pred_region
          _
        $region32: #{tpu_custom_call.1} parent=11 // pred_fallthru
          _
        // Predicated region
        $region33: #{tpu_custom_call.1} parent=11 // pred_check
          %p283 = pneg %p198
        $region34: #{tpu_custom_call.1} parent=11 // pred_check_branch
          %285 = sbr.rel (%p283) target = $region36
        $region35: #{tpu_custom_call.1} parent=11 // pred_region
          _
        $region36: #{tpu_custom_call.1} parent=11 // pred_fallthru
          _
        // Predicated region
        $region37: #{tpu_custom_call.1} parent=11 // pred_check
          %p286 = pneg %p219
        $region38: #{tpu_custom_call.1} parent=11 // pred_check_branch
          %288 = sbr.rel (%p286) target = $region40
        $region39: #{tpu_custom_call.1} parent=11 // pred_region
          _
        $region40: #{tpu_custom_call.1} parent=11 // pred_fallthru
          _
      $region12: #{tpu_custom_call.1} parent=5 // pred_fallthru
        _
      %p289 = scmp.lt.s32.totalorder %s20, 2
      // Predicated region
      $region41: #{tpu_custom_call.1} parent=5 // pred_check
        %p290 = pneg %p289
      $region42: #{tpu_custom_call.1} parent=5 // pred_check_branch
        %292 = sbr.rel (%p290) target = $region44
      $region43: #{tpu_custom_call.1} parent=5 // pred_region
        // Predicated region
        $region45: #{tpu_custom_call.1} parent=43 // pred_check
          %p293 = pneg %p82
        $region46: #{tpu_custom_call.1} parent=43 // pred_check_branch
          %295 = sbr.rel (%p293) target = $region48
        $region47: #{tpu_custom_call.1} parent=43 // pred_region
          %p296 = scmp.lt.s32.totalorder %s20, 1
          %s297 = scalar_select %p296, %s20, 1
          %s298 = smul.addr %s297, 2
          %s299 = smul.addr %s298, 4
          %s300 = scalar_lea.vmem %s2, %s299
        $region48: #{tpu_custom_call.1} parent=43 // pred_fallthru
          _
        // Predicated region
        $region49: #{tpu_custom_call.1} parent=43 // pred_check
          %p301 = pneg %p108
        $region50: #{tpu_custom_call.1} parent=43 // pred_check_branch
          %303 = sbr.rel (%p301) target = $region52
        $region51: #{tpu_custom_call.1} parent=43 // pred_region
          %p304 = scmp.lt.s32.totalorder %s20, 1
          %s305 = scalar_select %p304, %s20, 1
          %s306 = smul.addr %s305, 8
          %s307 = scalar_lea.vmem %s3, %s306
        $region52: #{tpu_custom_call.1} parent=43 // pred_fallthru
          _
      $region44: #{tpu_custom_call.1} parent=5 // pred_fallthru
        _
      %p308 = scmp.le.s32.totalorder 1, %s20
      %p309 = scmp.lt.s32.totalorder %s20, 3
      %p310 = pnand %p308, %p309
      %p311 = pneg %p310
      // Predicated region
      $region53: #{tpu_custom_call.1} parent=5 // pred_check
        _
      $region54: #{tpu_custom_call.1} parent=5 // pred_check_branch
        %313 = sbr.rel (%p310) target = $region56
      $region55: #{tpu_custom_call.1} parent=5 // pred_region
        %s314 = ssub.s32 %s20, 1
        // Predicated region
        $region57: #{tpu_custom_call.1} parent=55 // pred_check
          %p315 = pneg %p41
        $region58: #{tpu_custom_call.1} parent=55 // pred_check_branch
          %317 = sbr.rel (%p315) target = $region60
        $region59: #{tpu_custom_call.1} parent=55 // pred_region
          %318 = dma.done [#allocation5], 16
        $region60: #{tpu_custom_call.1} parent=55 // pred_fallthru
          _
        %319 = sfence
        %p320 = pneg %p41
        %p321 = pneg %p38
        %p322 = pneg %p62
        %p323 = pneg %p59
        %p324 = scmp.lt.s32.totalorder %s25, 1
        %s325 = scalar_select %p324, %s25, 1
        %s326 = smul.addr %s325, 2
        %s327 = smul.addr %s326, 4
        %s328 = scalar_lea.vmem %s2, %s327
        %p329 = pneg %p88
        %p330 = pneg %p85
        %p331 = scmp.lt.s32.totalorder %s25, 1
        %s332 = scalar_select %p331, %s25, 1
        %s333 = smul.addr %s332, 8
        %s334 = scalar_lea.vmem %s3, %s333
        %p335 = pneg %p114
        %p336 = pneg %p111
        %p337 = pneg %p135
        %p338 = pneg %p132
        %p339 = pneg %p156
        %p340 = pneg %p153
        %p341 = pneg %p177
        %p342 = pneg %p174
        %p343 = pneg %p198
        %p344 = pneg %p195
        %p345 = pneg %p219
        %p346 = pneg %p216
        %p347 = pneg %p245
        %p348 = pneg %p242
        %s349 = sand.u32 %s232, 1
        %s350 = scalar_lea.sflag [#allocation4], %s349
        %s351 = sand.u32 %s232, 1
        %s352 = smul.addr %s351, 8
        %s353 = scalar_lea.vmem [#allocation6], %s352
        %p354 = scmp.lt.s32.totalorder %s25, 1
        %s355 = scalar_select %p354, %s25, 1
        %s356 = smul.addr %s355, 2
        %s357 = smul.addr %s356, 4
        %s358 = scalar_lea.vmem %s2, %s357
        %p359 = scmp.lt.s32.totalorder %s25, 1
        %s360 = scalar_select %p359, %s25, 1
        %s361 = smul.addr %s360, 8
        %s362 = scalar_lea.vmem %s3, %s361
        %s363 = sld [smem:[#allocation3 + %s25]]
        %s364 = sld [smem:[#allocation2]]
        %v365 = vld [vmem:[%s358] sm:$0xff]
        %s366 = smul.f32 %s363, %s363
        %s367 = sadd.f32 %s366, 1.0
        %v368 = vstv %s367
        %v369 = vrsqrt.pop %v368
        %v370 = vmul.f32 %v368, %v369
        %vm371 = vcmp.eq.f32.partialorder %v368, inf
        %v372 = vsel %vm371, %v368, %v370
        %vm373 = vcmp.eq.f32.partialorder %v368, 0.0
        %v374 = vand.u32 %v368, 2147483648
        %v375 = vsel %vm373, %v374, %v372
        %s376 = vtos %v375
        %v377 = vstv %s376
        %v378 = vrcp.pop %v377
        %s379 = vtos %v378
        %v380 = vstv %s379
        %v381 = vmul.f32 %v365, %v380
        %v382 = vld [vmem:[%s4] sm:$0xff]
        %v383 = vld [vmem:[%s4 + $0x8] sm:$0xff]
        %v384 = vld [vmem:[%s4 + $0x10] sm:$0xff]
        %v385 = vld [vmem:[%s4 + $0x18] sm:$0xff]
        %v386 = vld [vmem:[%s5] sm:$0xff]
        %v387 = vld [vmem:[%s5 + $0x8] sm:$0xff]
        %v388 = vld [vmem:[%s5 + $0x10] sm:$0xff]
        %v389 = vld [vmem:[%s5 + $0x18] sm:$0xff]
        %391 = vset.pattern.permute.xlu0 0
        %392 = vperm.xlu0 %391, %v386
        %v393 = vpop.permute.xlu0 %392
        %396 = vset.pattern.permute.xlu0 0
        %397 = vperm.xlu0 %396, %v387
        %v398 = vpop.permute.xlu0 %397
        %401 = vset.pattern.permute.xlu0 0
        %402 = vperm.xlu0 %401, %v388
        %v403 = vpop.permute.xlu0 %402
        %406 = vset.pattern.permute.xlu0 0
        %407 = vperm.xlu0 %406, %v389
        %v408 = vpop.permute.xlu0 %407
        %v411 = vcombine.high %v381, %v381
        %vm412 = vcmask 31744
        %v414 = vsel %vm412, %v382, 0
        %v417 = vsel %vm412, %v383, 0
        %v420 = vsel %vm412, %v384, 0
        %v423 = vsel %vm412, %v385, 0
        %vm425 = vcmask 1043456
        %v426 = vsel %vm425, %v381, 0
        %v428 = vsel %vm425, %v411, 0
        %430 = vmatprep.subr.mxu0 %v428
        %431 = vmatpush1.msra.mxu0 %v426
        %432 = vmatprep.subr.mxu0 0.0
        %433 = vmatpush1.msra.mxu0 0.0
        %434 = vmatprep.subr.mxu0 0.0
        %435 = vmatpush1.msra.mxu0 0.0
        %436 = vmatprep.subr.mxu0 0.0
        %437 = vmatpush1.msra.mxu0 0.0
        %438 = vmatprep.subr.mxu0 0.0
        %439 = vmatpush1.msra.mxu0 0.0
        %440 = vmatprep.subr.mxu0 0.0
        %441 = vmatpush1.msra.mxu0 0.0
        %442 = vmatprep.subr.mxu0 0.0
        %443 = vmatpush1.msra.mxu0 0.0
        %444 = vmatprep.subr.mxu0 0.0
        %445 = vmatpush1.msra.mxu0 0.0
        %446 = vmatprep.subr.mxu0 0.0
        %447 = vmatpush1.msra.mxu0 0.0
        %448 = vmatprep.subr.mxu0 0.0
        %449 = vmatpush1.msra.mxu0 0.0
        %450 = vmatprep.subr.mxu0 0.0
        %451 = vmatpush1.msra.mxu0 0.0
        %452 = vmatprep.subr.mxu0 0.0
        %453 = vmatpush1.msra.mxu0 0.0
        %454 = vmatprep.subr.mxu0 0.0
        %455 = vmatpush1.msra.mxu0 0.0
        %456 = vmatprep.subr.mxu0 0.0
        %457 = vmatpush1.msra.mxu0 0.0
        %458 = vmatprep.subr.mxu0 0.0
        %459 = vmatpush1.msra.mxu0 0.0
        %460 = vmatprep.subr.mxu0 0.0
        %461 = vmatpush1.msra.mxu0 0.0
        %462 = vmatprep.subr.mxu0 0.0
        %463 = vmatpush1.msra.mxu0 0.0
        %464 = vmatprep.subr.mxu0 0.0
        %465 = vmatpush1.msra.mxu0 0.0
        %466 = vmatprep.subr.mxu0 0.0
        %467 = vmatpush1.msra.mxu0 0.0
        %468 = vmatprep.subr.mxu0 0.0
        %469 = vmatpush1.msra.mxu0 0.0
        %470 = vmatprep.subr.mxu0 0.0
        %471 = vmatpush1.msra.mxu0 0.0
        %472 = vmatprep.subr.mxu0 0.0
        %473 = vmatpush1.msra.mxu0 0.0
        %474 = vmatprep.subr.mxu0 0.0
        %475 = vmatpush1.msra.mxu0 0.0
        %476 = vmatprep.subr.mxu0 0.0
        %477 = vmatpush1.msra.mxu0 0.0
        %478 = vmatprep.subr.mxu0 0.0
        %479 = vmatpush1.msra.mxu0 0.0
        %480 = vmatprep.subr.mxu0 0.0
        %481 = vmatpush1.msra.mxu0 0.0
        %482 = vmatprep.subr.mxu0 0.0
        %483 = vmatpush1.msra.mxu0 0.0
        %484 = vmatprep.subr.mxu0 0.0
        %485 = vmatpush1.msra.mxu0 0.0
        %486 = vmatprep.subr.mxu0 0.0
        %487 = vmatpush1.msra.mxu0 0.0
        %488 = vmatprep.subr.mxu0 0.0
        %489 = vmatpush1.msra.mxu0 0.0
        %490 = vmatprep.subr.mxu0 0.0
        %491 = vmatpush1.msra.mxu0 0.0
        %492 = vmatprep.subr.mxu0 0.0
        %493 = vmatpush1.msra.mxu0 0.0
        %494 = vmatprep.mubr.f32.mxu0 0.0
        %495 = vmatmul.mubr.f32.gmra.mrb[0].mxu0 %v414
        %v496 = vpop.f32.mrb[0].mxu0
        %v497 = vadd.f32 %v393, %v496
        %v498 = vpop.f32.mrb[0].mxu0
        %v499 = vadd.f32 %v393, %v498
        %500 = vmatprep.mubr.f32.mxu0 0.0
        %501 = vmatmul.mubr.f32.gmra.mrb[0].mxu0 %v417
        %v502 = vpop.f32.mrb[0].mxu0
        %v503 = vadd.f32 %v398, %v502
        %v504 = vpop.f32.mrb[0].mxu0
        %v505 = vadd.f32 %v398, %v504
        %506 = vmatprep.mubr.f32.mxu0 0.0
        %507 = vmatmul.mubr.f32.gmra.mrb[0].mxu0 %v420
        %v508 = vpop.f32.mrb[0].mxu0
        %v509 = vadd.f32 %v403, %v508
        %v510 = vpop.f32.mrb[0].mxu0
        %v511 = vadd.f32 %v403, %v510
        %512 = vmatprep.mubr.f32.mxu0 0.0
        %513 = vmatmul.mubr.f32.gmra.mrb[0].mxu0 %v423
        %v514 = vpop.f32.mrb[0].mxu0
        %v515 = vadd.f32 %v408, %v514
        %v516 = vpop.f32.mrb[0].mxu0
        %v517 = vadd.f32 %v408, %v516
        %518 = vdwg.mxu0
        %v519 = vld [vmem:[%s6] sm:$0xff]
        %v520 = vld [vmem:[%s6 + $0x8] sm:$0xff]
        %v521 = vld [vmem:[%s6 + $0x10] sm:$0xff]
        %v522 = vld [vmem:[%s6 + $0x18] sm:$0xff]
        %v523 = vld [vmem:[%s362] sm:$0xff]
        %vm524 = vcmask 64512
        %v526 = vsel %vm524, %v519, 0
        %v529 = vsel %vm524, %v520, 0
        %v532 = vsel %vm524, %v521, 0
        %v535 = vsel %vm524, %v522, 0
        %537 = vmatprep.subr.mxu0 0.0
        %538 = vmatpush1.msra.mxu0 %v523
        %539 = vmatprep.subr.mxu0 0.0
        %540 = vmatpush1.msra.mxu0 0.0
        %541 = vmatprep.subr.mxu0 0.0
        %542 = vmatpush1.msra.mxu0 0.0
        %543 = vmatprep.subr.mxu0 0.0
        %544 = vmatpush1.msra.mxu0 0.0
        %545 = vmatprep.subr.mxu0 0.0
        %546 = vmatpush1.msra.mxu0 0.0
        %547 = vmatprep.subr.mxu0 0.0
        %548 = vmatpush1.msra.mxu0 0.0
        %549 = vmatprep.subr.mxu0 0.0
        %550 = vmatpush1.msra.mxu0 0.0
        %551 = vmatprep.subr.mxu0 0.0
        %552 = vmatpush1.msra.mxu0 0.0
        %553 = vmatprep.subr.mxu0 0.0
        %554 = vmatpush1.msra.mxu0 0.0
        %555 = vmatprep.subr.mxu0 0.0
        %556 = vmatpush1.msra.mxu0 0.0
        %557 = vmatprep.subr.mxu0 0.0
        %558 = vmatpush1.msra.mxu0 0.0
        %559 = vmatprep.subr.mxu0 0.0
        %560 = vmatpush1.msra.mxu0 0.0
        %561 = vmatprep.subr.mxu0 0.0
        %562 = vmatpush1.msra.mxu0 0.0
        %563 = vmatprep.subr.mxu0 0.0
        %564 = vmatpush1.msra.mxu0 0.0
        %565 = vmatprep.subr.mxu0 0.0
        %566 = vmatpush1.msra.mxu0 0.0
        %567 = vmatprep.subr.mxu0 0.0
        %568 = vmatpush1.msra.mxu0 0.0
        %569 = vmatprep.subr.mxu0 0.0
        %570 = vmatpush1.msra.mxu0 0.0
        %571 = vmatprep.subr.mxu0 0.0
        %572 = vmatpush1.msra.mxu0 0.0
        %573 = vmatprep.subr.mxu0 0.0
        %574 = vmatpush1.msra.mxu0 0.0
        %575 = vmatprep.subr.mxu0 0.0
        %576 = vmatpush1.msra.mxu0 0.0
        %577 = vmatprep.subr.mxu0 0.0
        %578 = vmatpush1.msra.mxu0 0.0
        %579 = vmatprep.subr.mxu0 0.0
        %580 = vmatpush1.msra.mxu0 0.0
        %581 = vmatprep.subr.mxu0 0.0
        %582 = vmatpush1.msra.mxu0 0.0
        %583 = vmatprep.subr.mxu0 0.0
        %584 = vmatpush1.msra.mxu0 0.0
        %585 = vmatprep.subr.mxu0 0.0
        %586 = vmatpush1.msra.mxu0 0.0
        %587 = vmatprep.subr.mxu0 0.0
        %588 = vmatpush1.msra.mxu0 0.0
        %589 = vmatprep.subr.mxu0 0.0
        %590 = vmatpush1.msra.mxu0 0.0
        %591 = vmatprep.subr.mxu0 0.0
        %592 = vmatpush1.msra.mxu0 0.0
        %593 = vmatprep.subr.mxu0 0.0
        %594 = vmatpush1.msra.mxu0 0.0
        %595 = vmatprep.subr.mxu0 0.0
        %596 = vmatpush1.msra.mxu0 0.0
        %597 = vmatprep.subr.mxu0 0.0
        %598 = vmatpush1.msra.mxu0 0.0
        %599 = vmatprep.subr.mxu0 0.0
        %600 = vmatpush1.msra.mxu0 0.0
        %601 = vmatprep.mubr.f32.mxu0 0.0
        %602 = vmatmul.mubr.f32.gmra.mrb[0].mxu0 %v526
        %v603 = vpop.f32.mrb[0].mxu0
        %v604 = vadd.f32 0.0, %v603
        %v605 = vpop.f32.mrb[0].mxu0
        %606 = vmatprep.mubr.f32.mxu0 0.0
        %607 = vmatmul.mubr.f32.gmra.mrb[0].mxu0 %v529
        %v608 = vpop.f32.mrb[0].mxu0
        %v609 = vadd.f32 0.0, %v608
        %v610 = vpop.f32.mrb[0].mxu0
        %611 = vmatprep.mubr.f32.mxu0 0.0
        %612 = vmatmul.mubr.f32.gmra.mrb[0].mxu0 %v532
        %v613 = vpop.f32.mrb[0].mxu0
        %v614 = vadd.f32 0.0, %v613
        %v615 = vpop.f32.mrb[0].mxu0
        %616 = vmatprep.mubr.f32.mxu0 0.0
        %617 = vmatmul.mubr.f32.gmra.mrb[0].mxu0 %v535
        %v618 = vpop.f32.mrb[0].mxu0
        %v619 = vadd.f32 0.0, %v618
        %v620 = vpop.f32.mrb[0].mxu0
        %621 = vdwg.mxu0
        %623 = vset.pattern.permute.xlu0 0
        %624 = vperm.xlu0 %623, %v604
        %v625 = vpop.permute.xlu0 %624
        %628 = vset.pattern.permute.xlu0 0
        %629 = vperm.xlu0 %628, %v609
        %v630 = vpop.permute.xlu0 %629
        %633 = vset.pattern.permute.xlu0 0
        %634 = vperm.xlu0 %633, %v614
        %v635 = vpop.permute.xlu0 %634
        %638 = vset.pattern.permute.xlu0 0
        %639 = vperm.xlu0 %638, %v619
        %v640 = vpop.permute.xlu0 %639
        %v642 = vadd.f32 %v497, %v625
        %v643 = vadd.f32 %v499, %v625
        %v644 = vadd.f32 %v503, %v630
        %v645 = vadd.f32 %v505, %v630
        %v646 = vadd.f32 %v509, %v635
        %v647 = vadd.f32 %v511, %v635
        %v648 = vadd.f32 %v515, %v640
        %v649 = vadd.f32 %v517, %v640
        %v650 = vmax.f32 %v642, 0.0
        %v651 = vmax.f32 %v643, 0.0
        %v652 = vmax.f32 %v644, 0.0
        %v653 = vmax.f32 %v645, 0.0
        %v654 = vmax.f32 %v646, 0.0
        %v655 = vmax.f32 %v647, 0.0
        %v656 = vmax.f32 %v648, 0.0
        %v657 = vmax.f32 %v649, 0.0
        %658 = vset.pattern.permute.xlu0 1
        %659 = vperm.xlu0 %658, %v604
        %v660 = vpop.permute.xlu0 %659
        %662 = vset.pattern.permute.xlu0 1
        %663 = vperm.xlu0 %662, %v609
        %v664 = vpop.permute.xlu0 %663
        %666 = vset.pattern.permute.xlu0 1
        %667 = vperm.xlu0 %666, %v614
        %v668 = vpop.permute.xlu0 %667
        %670 = vset.pattern.permute.xlu0 1
        %671 = vperm.xlu0 %670, %v619
        %v672 = vpop.permute.xlu0 %671
        %v674 = vadd.f32 %v497, %v660
        %v675 = vadd.f32 %v499, %v660
        %v676 = vadd.f32 %v503, %v664
        %v677 = vadd.f32 %v505, %v664
        %v678 = vadd.f32 %v509, %v668
        %v679 = vadd.f32 %v511, %v668
        %v680 = vadd.f32 %v515, %v672
        %v681 = vadd.f32 %v517, %v672
        %v682 = vmax.f32 %v674, 0.0
        %v683 = vmax.f32 %v675, 0.0
        %v684 = vmax.f32 %v676, 0.0
        %v685 = vmax.f32 %v677, 0.0
        %v686 = vmax.f32 %v678, 0.0
        %v687 = vmax.f32 %v679, 0.0
        %v688 = vmax.f32 %v680, 0.0
        %v689 = vmax.f32 %v681, 0.0
        %v690 = vsub.f32 %v682, %v650
        %v691 = vsub.f32 %v683, %v651
        %v692 = vsub.f32 %v684, %v652
        %v693 = vsub.f32 %v685, %v653
        %v694 = vsub.f32 %v686, %v654
        %v695 = vsub.f32 %v687, %v655
        %v696 = vsub.f32 %v688, %v656
        %v697 = vsub.f32 %v689, %v657
        %v698 = vstv %s364
        %v699 = vmul.f32 %v698, %v690
        %v700 = vmul.f32 %v698, %v691
        %v701 = vmul.f32 %v698, %v692
        %v702 = vmul.f32 %v698, %v693
        %v703 = vmul.f32 %v698, %v694
        %v704 = vmul.f32 %v698, %v695
        %v705 = vmul.f32 %v698, %v696
        %v706 = vmul.f32 %v698, %v697
        %v707 = vadd.f32 %v650, %v699
        %v708 = vadd.f32 %v651, %v700
        %v709 = vadd.f32 %v652, %v701
        %v710 = vadd.f32 %v653, %v702
        %v711 = vadd.f32 %v654, %v703
        %v712 = vadd.f32 %v655, %v704
        %v713 = vadd.f32 %v656, %v705
        %v714 = vadd.f32 %v657, %v706
        %v715 = vld [vmem:[%s7] sm:$0xf]
        %v716 = vld [vmem:[%s8] sm:$0xf]
        %718 = vset.pattern.permute.xlu0 0
        %719 = vperm.xlu0 %718, %v716
        %v720 = vpop.permute.xlu0 %719
        %vm722 = vcmask 261120
        %v724 = vsel %vm722, %v715, 0
        %726 = vmatprep.subr.mxu0 %v708
        %727 = vmatpush1.msra.mxu0 %v707
        %728 = vmatprep.subr.mxu0 %v710
        %729 = vmatpush1.msra.mxu0 %v709
        %730 = vmatprep.subr.mxu0 %v712
        %731 = vmatpush1.msra.mxu0 %v711
        %732 = vmatprep.subr.mxu0 %v714
        %733 = vmatpush1.msra.mxu0 %v713
        %734 = vmatprep.subr.mxu0 0.0
        %735 = vmatpush1.msra.mxu0 0.0
        %736 = vmatprep.subr.mxu0 0.0
        %737 = vmatpush1.msra.mxu0 0.0
        %738 = vmatprep.subr.mxu0 0.0
        %739 = vmatpush1.msra.mxu0 0.0
        %740 = vmatprep.subr.mxu0 0.0
        %741 = vmatpush1.msra.mxu0 0.0
        %742 = vmatprep.subr.mxu0 0.0
        %743 = vmatpush1.msra.mxu0 0.0
        %744 = vmatprep.subr.mxu0 0.0
        %745 = vmatpush1.msra.mxu0 0.0
        %746 = vmatprep.subr.mxu0 0.0
        %747 = vmatpush1.msra.mxu0 0.0
        %748 = vmatprep.subr.mxu0 0.0
        %749 = vmatpush1.msra.mxu0 0.0
        %750 = vmatprep.subr.mxu0 0.0
        %751 = vmatpush1.msra.mxu0 0.0
        %752 = vmatprep.subr.mxu0 0.0
        %753 = vmatpush1.msra.mxu0 0.0
        %754 = vmatprep.subr.mxu0 0.0
        %755 = vmatpush1.msra.mxu0 0.0
        %756 = vmatprep.subr.mxu0 0.0
        %757 = vmatpush1.msra.mxu0 0.0
        %758 = vmatprep.subr.mxu0 0.0
        %759 = vmatpush1.msra.mxu0 0.0
        %760 = vmatprep.subr.mxu0 0.0
        %761 = vmatpush1.msra.mxu0 0.0
        %762 = vmatprep.subr.mxu0 0.0
        %763 = vmatpush1.msra.mxu0 0.0
        %764 = vmatprep.subr.mxu0 0.0
        %765 = vmatpush1.msra.mxu0 0.0
        %766 = vmatprep.subr.mxu0 0.0
        %767 = vmatpush1.msra.mxu0 0.0
        %768 = vmatprep.subr.mxu0 0.0
        %769 = vmatpush1.msra.mxu0 0.0
        %770 = vmatprep.subr.mxu0 0.0
        %771 = vmatpush1.msra.mxu0 0.0
        %772 = vmatprep.subr.mxu0 0.0
        %773 = vmatpush1.msra.mxu0 0.0
        %774 = vmatprep.subr.mxu0 0.0
        %775 = vmatpush1.msra.mxu0 0.0
        %776 = vmatprep.subr.mxu0 0.0
        %777 = vmatpush1.msra.mxu0 0.0
        %778 = vmatprep.subr.mxu0 0.0
        %779 = vmatpush1.msra.mxu0 0.0
        %780 = vmatprep.subr.mxu0 0.0
        %781 = vmatpush1.msra.mxu0 0.0
        %782 = vmatprep.subr.mxu0 0.0
        %783 = vmatpush1.msra.mxu0 0.0
        %784 = vmatprep.subr.mxu0 0.0
        %785 = vmatpush1.msra.mxu0 0.0
        %786 = vmatprep.subr.mxu0 0.0
        %787 = vmatpush1.msra.mxu0 0.0
        %788 = vmatprep.subr.mxu0 0.0
        %789 = vmatpush1.msra.mxu0 0.0
        %790 = vmatprep.mubr.f32.mxu0 0.0
        %791 = vmatmul.mubr.f32.gmra.mrb[0].mxu0 %v724
        %v792 = vpop.f32.mrb[0].mxu0
        %v793 = vadd.f32 %v720, %v792
        %v794 = vpop.f32.mrb[0].mxu0
        %v795 = vadd.f32 %v720, %v794
        %796 = vdwg.mxu0
        %v797 = vstv %s363
        %v798 = vmul.f32 %v797, %v793
        %v799 = vmul.f32 %v797, %v795
        %v802 = vcombine.low %v798, %v799
        %v804 = vsub.f32 %v365, %v802
        %805 = vst [vmem:[%s353] sm:$0xff] %v804
        %s806 = sand.u32 %s232, 1
        %s807 = scalar_lea.sflag [#allocation4], %s806
        %s808 = sand.u32 %s232, 1
        %s809 = smul.addr %s808, 8
        %s810 = scalar_lea.vmem [#allocation6], %s809
        // Predicated region
        $region61: #{tpu_custom_call.1} parent=55 // pred_check
          %p811 = pneg %p242
        $region62: #{tpu_custom_call.1} parent=55 // pred_check_branch
          %813 = sbr.rel (%p811) target = $region64
        $region63: #{tpu_custom_call.1} parent=55 // pred_region
          %s815 = ssub.s32 128, 128
          %816 = vsyncadd %s807, %s815
          %s817 = smul.addr %s25, 2
          %s818 = smul.addr %s817, 64
          %s819 = scalar_lea.hbm %s9, %s818
          %s821 = sshll.u32 %s810, 4
          %s822 = int_to_ptr.vmem [resolvable:$true] %s821
          %824 = dma.vmem_to_hbm [thread:$0]  %s822, 128, %s819, %s807
        $region64: #{tpu_custom_call.1} parent=55 // pred_fallthru
          _
      $region56: #{tpu_custom_call.1} parent=5 // pred_fallthru
        _
      %p825 = scmp.le.s32.totalorder 2, %s20
      // Predicated region
      $region65: #{tpu_custom_call.1} parent=5 // pred_check
        %p826 = pneg %p825
      $region66: #{tpu_custom_call.1} parent=5 // pred_check_branch
        %828 = sbr.rel (%p826) target = $region68
      $region67: #{tpu_custom_call.1} parent=5 // pred_region
        %s829 = ssub.s32 %s20, 2
        // Predicated region
        $region69: #{tpu_custom_call.1} parent=67 // pred_check
          %p830 = pneg %p248
        $region70: #{tpu_custom_call.1} parent=67 // pred_check_branch
          %832 = sbr.rel (%p830) target = $region72
        $region71: #{tpu_custom_call.1} parent=67 // pred_region
          %s833 = sand.u32 %s233, 1
          %s834 = scalar_lea.sflag [#allocation4], %s833
          %s835 = sand.u32 %s233, 1
          %s836 = smul.addr %s835, 8
          %s837 = scalar_lea.vmem [#allocation6], %s836
          %838 = dma.done %s834, 128
        $region72: #{tpu_custom_call.1} parent=67 // pred_fallthru
          _
      $region68: #{tpu_custom_call.1} parent=5 // pred_fallthru
        _
    $region6: #{tpu_custom_call.1} parent=1 // loop_footer
      %s24 = sadd.s32 1, %s20
    $region7: #{tpu_custom_call.1} parent=1 // loop_footer_branch
      %19 = sbr.rel target = $region3
    $region8: #{tpu_custom_call.1} parent=1 // loop_exit
      _
    %839 = vsyncpa [#allocation4], 1
    %s840 = scalar_lea.sflag [#allocation4], 1
    %841 = vsyncpa %s840, 1
    %842 = vsyncpa [#allocation5], 1
    %s843 = scalar_lea.sflag [#allocation5], 1
    %844 = vsyncpa %s843, 1

</llo_original>
